<compile_context>
chip_gen: v7x
topology: tpu7x:2x2x1
jax: 0.10.0
libtpu: 0.0.40
codegen_flags: <defaults>
</compile_context>

<pallas_src>
import math

import jax
import jax.numpy as jnp
from jax import lax
from jax.experimental import pallas as pl
from jax.experimental.pallas import tpu as pltpu


def _attn_kernel(q_ref, wq_ref, k_ref, v_ref, vl_ref, o_ref):
    # q_ref  : (tq, dq)   compute dtype
    # wq_ref : (dq, dk)   compute dtype (resident across the whole grid)
    # k_ref  : (K,  dk)   compute dtype (resident across q-tiles of one batch)
    # v_ref  : (K,  vp)   compute dtype (vp = dv padded to a multiple of 128)
    # vl_ref : (tq, 1)    int32 valid lengths per query row
    # o_ref  : (tq, vp)   output dtype
    q = q_ref[...]
    wq = wq_ref[...]
    k = k_ref[...]
    v = v_ref[...]
    cd = q.dtype                                   # compute dtype for MXU inputs

    # ---- W_q projection (no bias); MXU with f32 accumulation.
    qp = jnp.dot(q, wq, preferred_element_type=jnp.float32)            # (tq, dk) f32

    # ---- scores = (q W_q) @ K^T / sqrt(dk)  (contract over dk, no explicit transpose)
    scores = lax.dot_general(
        qp.astype(cd), k,
        dimension_numbers=(((1,), (1,)), ((), ())),
        preferred_element_type=jnp.float32)                            # (tq, K) f32
    dk = wq.shape[1]
    scores = scores * jnp.float32(1.0 / math.sqrt(dk))

    # ---- masked softmax (d2l semantics: invalid key positions -> -1e6), f32.
    key_pos = lax.broadcasted_iota(jnp.int32, scores.shape, 1)         # (tq, K)
    scores = jnp.where(key_pos < vl_ref[...], scores, jnp.float32(-1e6))
    m = jnp.max(scores, axis=-1, keepdims=True)
    p = jnp.exp(scores - m)
    denom = jnp.sum(p, axis=-1, keepdims=True)
    attn = p * pl.reciprocal(denom, approx=False)   # approx=True is fine at prod scale

    # ---- dropout on attention weights: identity (eval mode).

    # ---- output = attn @ V ; MXU with f32 accumulation, single cast on store.
    out = jnp.dot(attn.astype(cd), v, preferred_element_type=jnp.float32)
    o_ref[...] = out.astype(o_ref.dtype)


def diffdim_attention(queries, keys, values, w_q, valid_lens=None, *,
                      tq=None, compute_dtype=None):
    """queries: (B,Q,dq); keys: (B,K,dk); values: (B,K,dv); w_q: (dq,dk);
    valid_lens: None, (B,) or (B,Q) ints."""
    B, Q, dq = queries.shape
    Bk, K, dk = keys.shape
    Bv, Kv, dv = values.shape
    assert B == Bk == Bv and K == Kv
    assert w_q.shape == (dq, dk)

    if compute_dtype is None:
        compute_dtype = queries.dtype              # set jnp.bfloat16 for production
    out_dtype = queries.dtype

    # Query row tile: whole Q if small, else a fixed 256-row tile.
    if tq is None:
        tq = Q if Q <= 256 else 256
    if tq != Q:
        assert Q % tq == 0 and tq % 8 == 0, (
            "tq must divide Q and be a multiple of 8 (pad Q or choose another tq)")

    # Lane-dense output: pad the value feature dim up to a multiple of 128.
    vp = ((dv + 127) // 128) * 128
    v_in = values if vp == dv else jnp.pad(values, ((0, 0), (0, 0), (0, vp - dv)))

    # Per-(batch, query-row) valid lengths, shape (B, Q, 1) int32.
    if valid_lens is None:
        vl = jnp.full((B, Q, 1), K, dtype=jnp.int32)
    elif valid_lens.ndim == 1:
        vl = jnp.broadcast_to(valid_lens.astype(jnp.int32)[:, None, None], (B, Q, 1))
    else:
        vl = valid_lens.astype(jnp.int32).reshape(B, Q, 1)

    q_c = queries.astype(compute_dtype)
    wq_c = w_q.astype(compute_dtype)
    k_c = keys.astype(compute_dtype)
    v_c = v_in.astype(compute_dtype)

    grid = (B, Q // tq)

    out = pl.pallas_call(
        _attn_kernel,
        out_shape=jax.ShapeDtypeStruct((B, Q, vp), out_dtype),
        grid_spec=pltpu.PrefetchScalarGridSpec(
            num_scalar_prefetch=0,
            grid=grid,
            in_specs=[
                pl.BlockSpec((None, tq, dq), lambda b, qi: (b, qi, 0)),   # q tile
                pl.BlockSpec((dq, dk),       lambda b, qi: (0, 0)),       # W_q (resident)
                pl.BlockSpec((None, K, dk),  lambda b, qi: (b, 0, 0)),    # keys (per batch)
                pl.BlockSpec((None, K, vp),  lambda b, qi: (b, 0, 0)),    # values (lane-padded)
                pl.BlockSpec((None, tq, 1),  lambda b, qi: (b, qi, 0)),   # valid lens
            ],
            out_specs=pl.BlockSpec((None, tq, vp), lambda b, qi: (b, qi, 0)),
        ),
        compiler_params=pltpu.CompilerParams(
            dimension_semantics=("parallel", "parallel")),
    )(q_c, wq_c, k_c, v_c, vl)

    return out[..., :dv]


def _ref_attention(queries, keys, values, w_q, valid_lens=None):
    qp = jnp.einsum("bqd,dk->bqk", queries, w_q)
    d = qp.shape[-1]
    scores = jnp.einsum("bqk,bsk->bqs", qp, keys) / math.sqrt(d)
    if valid_lens is not None:
        vl = valid_lens[:, None, None] if valid_lens.ndim == 1 else valid_lens[:, :, None]
        pos = jnp.arange(scores.shape[-1])[None, None, :]
        scores = jnp.where(pos < vl, scores, -1e6)
    attn = jax.nn.softmax(scores, axis=-1)
    return jnp.einsum("bqs,bsv->bqv", attn, values)


if __name__ == "__main__":
    # Small shapes consistent with the module: query dim 16 != key dim 32 ("diff dim").
    B, Q, K = 2, 8, 10
    DQ, DK, DV = 16, 32, 32

    key = jax.random.PRNGKey(0)
    k_q, k_k, k_v, k_w = jax.random.split(key, 4)
    queries = jax.random.normal(k_q, (B, Q, DQ), dtype=jnp.float32)
    keys = jax.random.normal(k_k, (B, K, DK), dtype=jnp.float32)
    values = jax.random.normal(k_v, (B, K, DV), dtype=jnp.float32)
    lim = 1.0 / math.sqrt(DQ)                       # PyTorch Linear-style uniform bound
    w_q = jax.random.uniform(k_w, (DQ, DK), jnp.float32, -lim, lim)
    valid_lens = jnp.array([6, 9], dtype=jnp.int32)

    # f32 path, with per-batch masking.
    out = jax.block_until_ready(diffdim_attention(queries, keys, values, w_q, valid_lens))
    ref = _ref_attention(queries, keys, values, w_q, valid_lens)
    assert out.shape == (B, Q, DV)
    assert jnp.allclose(out, ref, atol=1e-4, rtol=1e-4), "f32 masked mismatch vs reference"

    # f32 path, no masking (valid_lens=None).
    out2 = jax.block_until_ready(diffdim_attention(queries, keys, values, w_q, None))
    ref2 = _ref_attention(queries, keys, values, w_q, None)
    assert jnp.allclose(out2, ref2, atol=1e-4, rtol=1e-4), "f32 unmasked mismatch vs reference"

    # bf16-MXU path (production recommendation): f32 accumulation, looser tolerance.
    out3 = jax.block_until_ready(
        diffdim_attention(queries, keys, values, w_q, valid_lens,
                          compute_dtype=jnp.bfloat16))
    assert jnp.allclose(out3, ref, atol=5e-2, rtol=5e-2), "bf16 mismatch vs reference"

    print("KERNEL_OK")
</pallas_src>

<mosaic_0001>
module attributes {stable_mosaic.version = 11 : i64} {
  func.func @_attn_kernel(%arg0: i32, %arg1: i32, %arg2: memref<1x8x16xf32, #tpu.memory_space<vmem>>, %arg3: memref<16x32xf32, #tpu.memory_space<vmem>>, %arg4: memref<1x10x32xf32, #tpu.memory_space<vmem>>, %arg5: memref<1x10x128xf32, #tpu.memory_space<vmem>>, %arg6: memref<1x8x1xi32, #tpu.memory_space<vmem>>, %arg7: memref<1x8x128xf32, #tpu.memory_space<vmem>>) attributes {dimension_semantics = [#tpu.dimension_semantics<parallel>, #tpu.dimension_semantics<parallel>], iteration_bounds = array<i64: 2, 1>, scalar_prefetch = 0 : i64, scratch_operands = 0 : i64, tpu.core_type = #tpu.core_type<tc>, window_params = [{transform_indices = @transform_0, window_bounds = array<i64: 1, 8, 16>}, {pipeline_mode = #tpu.pipeline_mode<synchronous>, transform_indices = @transform_1, window_bounds = array<i64: 16, 32>}, {transform_indices = @transform_2, window_bounds = array<i64: 1, 10, 32>}, {transform_indices = @transform_3, window_bounds = array<i64: 1, 10, 128>}, {transform_indices = @transform_4, window_bounds = array<i64: 1, 8, 1>}, {transform_indices = @transform_5, window_bounds = array<i64: 1, 8, 128>}]} {
    %c0 = arith.constant 0 : index
    %c0_0 = arith.constant 0 : index
    %c0_1 = arith.constant 0 : index
    %0 = vector.load %arg2[%c0, %c0_0, %c0_1] : memref<1x8x16xf32, #tpu.memory_space<vmem>>, vector<1x8x16xf32>
    %1 = vector.shape_cast %0 : vector<1x8x16xf32> to vector<8x16xf32>
    %c0_2 = arith.constant 0 : index
    %c0_3 = arith.constant 0 : index
    %2 = vector.load %arg3[%c0_2, %c0_3] : memref<16x32xf32, #tpu.memory_space<vmem>>, vector<16x32xf32>
    %c0_4 = arith.constant 0 : index
    %c0_5 = arith.constant 0 : index
    %c0_6 = arith.constant 0 : index
    %3 = vector.load %arg4[%c0_4, %c0_5, %c0_6] : memref<1x10x32xf32, #tpu.memory_space<vmem>>, vector<1x10x32xf32>
    %4 = vector.shape_cast %3 : vector<1x10x32xf32> to vector<10x32xf32>
    %c0_7 = arith.constant 0 : index
    %c0_8 = arith.constant 0 : index
    %c0_9 = arith.constant 0 : index
    %5 = vector.load %arg5[%c0_7, %c0_8, %c0_9] : memref<1x10x128xf32, #tpu.memory_space<vmem>>, vector<1x10x128xf32>
    %6 = vector.shape_cast %5 : vector<1x10x128xf32> to vector<10x128xf32>
    %cst = arith.constant dense<0.000000e+00> : vector<8x32xf32>
    %7 = tpu.matmul %1, %2, %cst {dimension_numbers = #tpu.dot_dimension_numbers<[1], [0], [0], [1], [0, 0, 1, 1], [], []>} : vector<8x16xf32>, vector<16x32xf32>, vector<8x32xf32> -> vector<8x32xf32>
    %cst_10 = arith.constant dense<0.000000e+00> : vector<8x10xf32>
    %8 = tpu.matmul %7, %4, %cst_10 {dimension_numbers = #tpu.dot_dimension_numbers<[1], [1], [0], [0], [0, 0, 1, 0], [], []>} : vector<8x32xf32>, vector<10x32xf32>, vector<8x10xf32> -> vector<8x10xf32>
    %cst_11 = arith.constant 0.176776692 : f32
    %9 = vector.broadcast %cst_11 : f32 to vector<8x10xf32>
    %10 = arith.mulf %8, %9 : vector<8x10xf32>
    %11 = tpu.iota {dimensions = array<i32: 1>} : vector<8x10xi32>
    %c0_12 = arith.constant 0 : index
    %c0_13 = arith.constant 0 : index
    %c0_14 = arith.constant 0 : index
    %12 = vector.load %arg6[%c0_12, %c0_13, %c0_14] : memref<1x8x1xi32, #tpu.memory_space<vmem>>, vector<1x8x1xi32>
    %13 = vector.shape_cast %12 : vector<1x8x1xi32> to vector<8x1xi32>
    %14 = vector.broadcast %13 : vector<8x1xi32> to vector<8x10xi32>
    %15 = arith.cmpi slt, %11, %14 : vector<8x10xi32>
    %cst_15 = arith.constant -1.000000e+06 : f32
    %16 = vector.broadcast %cst_15 : f32 to vector<8x10xf32>
    %17 = arith.select %15, %10, %16 : vector<8x10xi1>, vector<8x10xf32>
    %cst_16 = arith.constant dense<0xFF800000> : vector<8xf32>
    %18 = vector.multi_reduction <maximumf>, %17, %cst_16 [1] : vector<8x10xf32> to vector<8xf32>
    %19 = vector.shape_cast %18 : vector<8xf32> to vector<8x1xf32>
    %20 = vector.broadcast %19 : vector<8x1xf32> to vector<8x10xf32>
    %21 = arith.subf %17, %20 : vector<8x10xf32>
    %22 = math.exp %21 : vector<8x10xf32>
    %cst_17 = arith.constant dense<0.000000e+00> : vector<8xf32>
    %23 = vector.multi_reduction <add>, %22, %cst_17 [1] : vector<8x10xf32> to vector<8xf32>
    %24 = vector.shape_cast %23 : vector<8xf32> to vector<8x1xf32>
    %25 = tpu.reciprocal %24 : vector<8x1xf32> -> vector<8x1xf32>
    %26 = vector.broadcast %25 : vector<8x1xf32> to vector<8x10xf32>
    %27 = arith.mulf %22, %26 : vector<8x10xf32>
    %cst_18 = arith.constant dense<0.000000e+00> : vector<8x128xf32>
    %28 = tpu.matmul %27, %6, %cst_18 {dimension_numbers = #tpu.dot_dimension_numbers<[1], [0], [0], [1], [0, 0, 1, 1], [], []>} : vector<8x10xf32>, vector<10x128xf32>, vector<8x128xf32> -> vector<8x128xf32>
    %c0_19 = arith.constant 0 : index
    %c0_20 = arith.constant 0 : index
    %c0_21 = arith.constant 0 : index
    %29 = vector.load %arg7[%c0_19, %c0_20, %c0_21] : memref<1x8x128xf32, #tpu.memory_space<vmem>>, vector<1x8x128xf32>
    %30 = vector.shape_cast %29 : vector<1x8x128xf32> to vector<8x128xf32>
    %31 = vector.shape_cast %28 : vector<8x128xf32> to vector<1x8x128xf32>
    tpu.vector_store %arg7[%c0_19, %c0_20, %c0_21], %31 {strides = array<i32>} : memref<1x8x128xf32, #tpu.memory_space<vmem>>, vector<1x8x128xf32>,
    return
  }
  func.func @transform_0(%arg0: i32, %arg1: i32) -> (i32, i32, i32) {
    %c0_i32 = arith.constant 0 : i32
    %c0_i32_0 = arith.constant 0 : i32
    return %arg0, %arg1, %c0_i32 : i32, i32, i32
  }
  func.func @transform_1(%arg0: i32, %arg1: i32) -> (i32, i32) {
    %c0_i32 = arith.constant 0 : i32
    %c0_i32_0 = arith.constant 0 : i32
    %c0_i32_1 = arith.constant 0 : i32
    return %c0_i32, %c0_i32_0 : i32, i32
  }
  func.func @transform_2(%arg0: i32, %arg1: i32) -> (i32, i32, i32) {
    %c0_i32 = arith.constant 0 : i32
    %c0_i32_0 = arith.constant 0 : i32
    %c0_i32_1 = arith.constant 0 : i32
    return %arg0, %c0_i32, %c0_i32_0 : i32, i32, i32
  }
  func.func @transform_3(%arg0: i32, %arg1: i32) -> (i32, i32, i32) {
    %c0_i32 = arith.constant 0 : i32
    %c0_i32_0 = arith.constant 0 : i32
    %c0_i32_1 = arith.constant 0 : i32
    return %arg0, %c0_i32, %c0_i32_0 : i32, i32, i32
  }
  func.func @transform_4(%arg0: i32, %arg1: i32) -> (i32, i32, i32) {
    %c0_i32 = arith.constant 0 : i32
    %c0_i32_0 = arith.constant 0 : i32
    return %arg0, %arg1, %c0_i32 : i32, i32, i32
  }
  func.func @transform_5(%arg0: i32, %arg1: i32) -> (i32, i32, i32) {
    %c0_i32 = arith.constant 0 : i32
    %c0_i32_0 = arith.constant 0 : i32
    return %arg0, %arg1, %c0_i32 : i32, i32, i32
  }
}

</mosaic_0001>

<llo_original>
// kernel: tpu_custom_call.1
$region0: #{tpu_custom_call.1}
  #allocation0 [shape = 'u32[]', space=smem, size = 0x4, offset = 0x4, fixed_abs, tag = 'smem constant byte address 0x4 - core index']
  #allocation1 [shape = 'u32[144,128]{1,0:T(1,128)}', space=vmem, size = 0x12000, scoped, tag = 'internal scratch']
  %s0 = inlined_call_operand.vmem [shape: f32[2,8,16], index: 0, kind: input, shape index: {}]
  %s1 = inlined_call_operand.vmem [shape: f32[16,32], index: 1, kind: input, shape index: {}]
  %s2 = inlined_call_operand.vmem [shape: f32[2,10,32], index: 2, kind: input, shape index: {}]
  %s3 = inlined_call_operand.vmem [shape: f32[2,10,128], index: 3, kind: input, shape index: {}]
  %s4 = inlined_call_operand.vmem [shape: s32[2,8,1], index: 4, kind: input, shape index: {}]
  %s5 = inlined_call_operand.hbm [shape: f32[2,8,128], index: 5, kind: output, shape index: {}]
  %s6 = sld [smem:[#allocation0]]
  $region53: #{tpu_custom_call.1} parent=0
    _
  %s8 = ssub.s32 1, %s6
  %s9 = scalar_select 0, %s8, %s6
  $region1: #{tpu_custom_call.1} parent=0
    #allocation2 [shape = 'u8[8192]{0}', space=vmem, size = 0x2000, scoped, tag = 'output window, operand 0']
    #allocation3 [shape = 's32[2]{0}', space=sflag, size = 0x8, scoped, tag = 'scoped memory for tpu_custom_call.1']
    %10 = vsyncpa [#allocation3], 0
    %s11 = scalar_lea.sflag [#allocation3], 1
    %12 = vsyncpa %s11, 0
    loop: start=0, step=1, limit=4
    $region2: #{tpu_custom_call.1} parent=1 // loop_pre_header
      _
    $region3: #{tpu_custom_call.1} parent=1 // loop_header
      %s14 = sphi 0, %s18
      %p15 = scmp.ge.s32.totalorder %s14, 4
      %s21 = sphi 0, %s33
      %s22 = sphi 0, %s29
      %s23 = sphi 0, %s21
      %s24 = sphi 0, %s22
      %s25 = sphi 0, %s23
      %s26 = sphi 0, %s24
      %s38 = sphi 0, %s40
      %s41 = sphi 0, %s38
      %s42 = sphi 0, %s41
      %s58 = sphi 0, %s42
      %s62 = sphi 0, %s62
      %s64 = sphi 0, %s62
      %s65 = sphi 0, %s64
      %s79 = sphi 0, %s65
      %s85 = sphi 0, %s87
      %s88 = sphi 0, %s85
      %s89 = sphi 0, %s88
      %s105 = sphi 0, %s89
      %s111 = sphi 0, %s113
      %s114 = sphi 0, %s111
      %s115 = sphi 0, %s114
      %s131 = sphi 0, %s115
      %s139 = sphi 0, %s141
      %s142 = sphi 0, %s139
      %s143 = sphi 0, %s142
      %s159 = sphi 0, %s143
      %s167 = sphi 0, %s169
      %s170 = sphi 0, %s167
      %s171 = sphi 0, %s170
      %s187 = sphi 0, %s171
    $region4: #{tpu_custom_call.1} parent=1 // loop_header_branch
      %17 = sbr.rel (%p15) target = $region8
    $region5: #{tpu_custom_call.1} parent=1 // loop_body
      %s19 = ssub.s32 %s14, 1
      %s20 = ssub.s32 %s14, 2
      %s27 = sadd.s32 1, %s22
      %p28 = scmp.ge.s32.totalorder %s27, 1
      %s29 = scalar_select %p28, 0, %s27
      %s30 = sadd.s32 1, %s21
      %s31 = scalar_select %p28, %s30, %s21
      %p32 = scmp.ge.s32.totalorder %s31, 2
      %s33 = scalar_select %p32, 0, %s31
      %s34 = ssub.s32 %s21, %s33
      %s35 = ssub.s32 %s22, %s29
      %s36 = sor.u32 %s34, %s35
      %p37 = scmp.eq.s32.totalorder %s36, 0
      %s39 = sadd.s32 %s38, 1
      %s40 = scalar_select %p37, %s38, %s39
      %p43 = pneg %p37
      %p44 = scmp.eq.s32.totalorder %s14, 1
      %p45 = por %p43, %p44
      %p46 = scmp.ne.s32.totalorder %s38, %s41
      %p47 = scmp.eq.s32.totalorder %s14, 0
      %p48 = por %p46, %p47
      %p49 = scmp.ne.s32.totalorder %s38, %s41
      %p50 = scmp.eq.s32.totalorder %s19, 1
      %p51 = por %p49, %p50
      %p52 = scmp.ne.s32.totalorder %s41, %s42
      %p53 = scmp.eq.s32.totalorder %s19, 0
      %p54 = por %p52, %p53
      %p55 = scmp.ne.s32.totalorder %s41, %s42
      %p56 = scmp.eq.s32.totalorder %s20, 1
      %p57 = por %p55, %p56
      %p59 = scmp.ne.s32.totalorder %s42, %s58
      %p60 = scmp.eq.s32.totalorder %s20, 0
      %p61 = por %p59, %p60
      %s63 = sadd.s32 %s62, 1
      %p66 = scmp.eq.s32.totalorder %s14, 1
      %p67 = scmp.ne.s32.totalorder %s62, %s64
      %p68 = scmp.eq.s32.totalorder %s14, 0
      %p69 = por %p67, %p68
      %p70 = scmp.ne.s32.totalorder %s62, %s64
      %p71 = scmp.eq.s32.totalorder %s19, 1
      %p72 = por %p70, %p71
      %p73 = scmp.ne.s32.totalorder %s64, %s65
      %p74 = scmp.eq.s32.totalorder %s19, 0
      %p75 = por %p73, %p74
      %p76 = scmp.ne.s32.totalorder %s64, %s65
      %p77 = scmp.eq.s32.totalorder %s20, 1
      %p78 = por %p76, %p77
      %p80 = scmp.ne.s32.totalorder %s65, %s79
      %p81 = scmp.eq.s32.totalorder %s20, 0
      %p82 = por %p80, %p81
      %s83 = ssub.s32 %s21, %s33
      %p84 = scmp.eq.s32.totalorder %s83, 0
      %s86 = sadd.s32 %s85, 1
      %s87 = scalar_select %p84, %s85, %s86
      %p90 = pneg %p84
      %p91 = scmp.eq.s32.totalorder %s14, 1
      %p92 = por %p90, %p91
      %p93 = scmp.ne.s32.totalorder %s85, %s88
      %p94 = scmp.eq.s32.totalorder %s14, 0
      %p95 = por %p93, %p94
      %p96 = scmp.ne.s32.totalorder %s85, %s88
      %p97 = scmp.eq.s32.totalorder %s19, 1
      %p98 = por %p96, %p97
      %p99 = scmp.ne.s32.totalorder %s88, %s89
      %p100 = scmp.eq.s32.totalorder %s19, 0
      %p101 = por %p99, %p100
      %p102 = scmp.ne.s32.totalorder %s88, %s89
      %p103 = scmp.eq.s32.totalorder %s20, 1
      %p104 = por %p102, %p103
      %p106 = scmp.ne.s32.totalorder %s89, %s105
      %p107 = scmp.eq.s32.totalorder %s20, 0
      %p108 = por %p106, %p107
      %s109 = ssub.s32 %s21, %s33
      %p110 = scmp.eq.s32.totalorder %s109, 0
      %s112 = sadd.s32 %s111, 1
      %s113 = scalar_select %p110, %s111, %s112
      %p116 = pneg %p110
      %p117 = scmp.eq.s32.totalorder %s14, 1
      %p118 = por %p116, %p117
      %p119 = scmp.ne.s32.totalorder %s111, %s114
      %p120 = scmp.eq.s32.totalorder %s14, 0
      %p121 = por %p119, %p120
      %p122 = scmp.ne.s32.totalorder %s111, %s114
      %p123 = scmp.eq.s32.totalorder %s19, 1
      %p124 = por %p122, %p123
      %p125 = scmp.ne.s32.totalorder %s114, %s115
      %p126 = scmp.eq.s32.totalorder %s19, 0
      %p127 = por %p125, %p126
      %p128 = scmp.ne.s32.totalorder %s114, %s115
      %p129 = scmp.eq.s32.totalorder %s20, 1
      %p130 = por %p128, %p129
      %p132 = scmp.ne.s32.totalorder %s115, %s131
      %p133 = scmp.eq.s32.totalorder %s20, 0
      %p134 = por %p132, %p133
      %s135 = ssub.s32 %s21, %s33
      %s136 = ssub.s32 %s22, %s29
      %s137 = sor.u32 %s135, %s136
      %p138 = scmp.eq.s32.totalorder %s137, 0
      %s140 = sadd.s32 %s139, 1
      %s141 = scalar_select %p138, %s139, %s140
      %p144 = pneg %p138
      %p145 = scmp.eq.s32.totalorder %s14, 1
      %p146 = por %p144, %p145
      %p147 = scmp.ne.s32.totalorder %s139, %s142
      %p148 = scmp.eq.s32.totalorder %s14, 0
      %p149 = por %p147, %p148
      %p150 = scmp.ne.s32.totalorder %s139, %s142
      %p151 = scmp.eq.s32.totalorder %s19, 1
      %p152 = por %p150, %p151
      %p153 = scmp.ne.s32.totalorder %s142, %s143
      %p154 = scmp.eq.s32.totalorder %s19, 0
      %p155 = por %p153, %p154
      %p156 = scmp.ne.s32.totalorder %s142, %s143
      %p157 = scmp.eq.s32.totalorder %s20, 1
      %p158 = por %p156, %p157
      %p160 = scmp.ne.s32.totalorder %s143, %s159
      %p161 = scmp.eq.s32.totalorder %s20, 0
      %p162 = por %p160, %p161
      %s163 = ssub.s32 %s21, %s33
      %s164 = ssub.s32 %s22, %s29
      %s165 = sor.u32 %s163, %s164
      %p166 = scmp.eq.s32.totalorder %s165, 0
      %s168 = sadd.s32 %s167, 1
      %s169 = scalar_select %p166, %s167, %s168
      %p172 = pneg %p166
      %p173 = scmp.eq.s32.totalorder %s14, 1
      %p174 = por %p172, %p173
      %p175 = scmp.ne.s32.totalorder %s167, %s170
      %p176 = scmp.eq.s32.totalorder %s14, 0
      %p177 = por %p175, %p176
      %p178 = scmp.ne.s32.totalorder %s167, %s170
      %p179 = scmp.eq.s32.totalorder %s19, 1
      %p180 = por %p178, %p179
      %p181 = scmp.ne.s32.totalorder %s170, %s171
      %p182 = scmp.eq.s32.totalorder %s19, 0
      %p183 = por %p181, %p182
      %p184 = scmp.ne.s32.totalorder %s170, %s171
      %p185 = scmp.eq.s32.totalorder %s20, 1
      %p186 = por %p184, %p185
      %p188 = scmp.ne.s32.totalorder %s171, %s187
      %p189 = scmp.eq.s32.totalorder %s20, 0
      %p190 = por %p188, %p189
      %p191 = scmp.le.s32.totalorder 1, %s14
      %p192 = scmp.lt.s32.totalorder %s14, 3
      %p193 = pnand %p191, %p192
      %p194 = pneg %p193
      // Predicated region
      $region9: #{tpu_custom_call.1} parent=5 // pred_check
        _
      $region10: #{tpu_custom_call.1} parent=5 // pred_check_branch
        %196 = sbr.rel (%p193) target = $region12
      $region11: #{tpu_custom_call.1} parent=5 // pred_region
        %s197 = ssub.s32 %s14, 1
        // Predicated region
        $region13: #{tpu_custom_call.1} parent=11 // pred_check
          %p198 = pneg %p75
        $region14: #{tpu_custom_call.1} parent=11 // pred_check_branch
          %200 = sbr.rel (%p198) target = $region16
        $region15: #{tpu_custom_call.1} parent=11 // pred_region
          _
        $region16: #{tpu_custom_call.1} parent=11 // pred_fallthru
          _
      $region12: #{tpu_custom_call.1} parent=5 // pred_fallthru
        _
      %p201 = scmp.lt.s32.totalorder %s14, 2
      // Predicated region
      $region17: #{tpu_custom_call.1} parent=5 // pred_check
        %p202 = pneg %p201
      $region18: #{tpu_custom_call.1} parent=5 // pred_check_branch
        %204 = sbr.rel (%p202) target = $region20
      $region19: #{tpu_custom_call.1} parent=5 // pred_region
        // Predicated region
        $region21: #{tpu_custom_call.1} parent=19 // pred_check
          %p205 = pneg %p48
        $region22: #{tpu_custom_call.1} parent=19 // pred_check_branch
          %207 = sbr.rel (%p205) target = $region24
        $region23: #{tpu_custom_call.1} parent=19 // pred_region
          %p208 = scmp.lt.s32.totalorder %s21, 1
          %s209 = scalar_select %p208, %s21, 1
          %p210 = scmp.lt.s32.totalorder %s22, 0
          %s211 = scalar_select %p210, %s22, 0
          %s212 = sadd.s32 %s211, %s209
          %s213 = smul.addr %s212, 8
          %s214 = scalar_lea.vmem %s0, %s213
        $region24: #{tpu_custom_call.1} parent=19 // pred_fallthru
          _
        // Predicated region
        $region25: #{tpu_custom_call.1} parent=19 // pred_check
          %p215 = pneg %p95
        $region26: #{tpu_custom_call.1} parent=19 // pred_check_branch
          %217 = sbr.rel (%p215) target = $region28
        $region27: #{tpu_custom_call.1} parent=19 // pred_region
          %p218 = scmp.lt.s32.totalorder %s21, 1
          %s219 = scalar_select %p218, %s21, 1
          %s220 = smul.addr %s219, 2
          %s221 = smul.addr %s220, 8
          %s222 = scalar_lea.vmem %s2, %s221
        $region28: #{tpu_custom_call.1} parent=19 // pred_fallthru
          _
        // Predicated region
        $region29: #{tpu_custom_call.1} parent=19 // pred_check
          %p223 = pneg %p121
        $region30: #{tpu_custom_call.1} parent=19 // pred_check_branch
          %225 = sbr.rel (%p223) target = $region32
        $region31: #{tpu_custom_call.1} parent=19 // pred_region
          %p226 = scmp.lt.s32.totalorder %s21, 1
          %s227 = scalar_select %p226, %s21, 1
          %s228 = smul.addr %s227, 2
          %s229 = smul.addr %s228, 8
          %s230 = scalar_lea.vmem %s3, %s229
        $region32: #{tpu_custom_call.1} parent=19 // pred_fallthru
          _
        // Predicated region
        $region33: #{tpu_custom_call.1} parent=19 // pred_check
          %p231 = pneg %p149
        $region34: #{tpu_custom_call.1} parent=19 // pred_check_branch
          %233 = sbr.rel (%p231) target = $region36
        $region35: #{tpu_custom_call.1} parent=19 // pred_region
          %p234 = scmp.lt.s32.totalorder %s21, 1
          %s235 = scalar_select %p234, %s21, 1
          %p236 = scmp.lt.s32.totalorder %s22, 0
          %s237 = scalar_select %p236, %s22, 0
          %s238 = sadd.s32 %s237, %s235
          %s239 = smul.addr %s238, 8
          %s240 = scalar_lea.vmem %s4, %s239
        $region36: #{tpu_custom_call.1} parent=19 // pred_fallthru
          _
      $region20: #{tpu_custom_call.1} parent=5 // pred_fallthru
        _
      %p241 = scmp.le.s32.totalorder 1, %s14
      %p242 = scmp.lt.s32.totalorder %s14, 3
      %p243 = pnand %p241, %p242
      %p244 = pneg %p243
      // Predicated region
      $region37: #{tpu_custom_call.1} parent=5 // pred_check
        _
      $region38: #{tpu_custom_call.1} parent=5 // pred_check_branch
        %246 = sbr.rel (%p243) target = $region40
      $region39: #{tpu_custom_call.1} parent=5 // pred_region
        %s247 = ssub.s32 %s14, 1
        %p248 = scmp.lt.s32.totalorder %s23, 1
        %s249 = scalar_select %p248, %s23, 1
        %p250 = scmp.lt.s32.totalorder %s24, 0
        %s251 = scalar_select %p250, %s24, 0
        %s252 = sadd.s32 %s251, %s249
        %s253 = smul.addr %s252, 8
        %s254 = scalar_lea.vmem %s0, %s253
        %p255 = pneg %p54
        %p256 = pneg %p51
        %p257 = pneg %p75
        %p258 = pneg %p72
        %p259 = scmp.lt.s32.totalorder %s23, 1
        %s260 = scalar_select %p259, %s23, 1
        %s261 = smul.addr %s260, 2
        %s262 = smul.addr %s261, 8
        %s263 = scalar_lea.vmem %s2, %s262
        %p264 = pneg %p101
        %p265 = pneg %p98
        %p266 = scmp.lt.s32.totalorder %s23, 1
        %s267 = scalar_select %p266, %s23, 1
        %s268 = smul.addr %s267, 2
        %s269 = smul.addr %s268, 8
        %s270 = scalar_lea.vmem %s3, %s269
        %p271 = pneg %p127
        %p272 = pneg %p124
        %p273 = scmp.lt.s32.totalorder %s23, 1
        %s274 = scalar_select %p273, %s23, 1
        %p275 = scmp.lt.s32.totalorder %s24, 0
        %s276 = scalar_select %p275, %s24, 0
        %s277 = sadd.s32 %s276, %s274
        %s278 = smul.addr %s277, 8
        %s279 = scalar_lea.vmem %s4, %s278
        %p280 = pneg %p155
        %p281 = pneg %p152
        %p282 = pneg %p183
        %p283 = pneg %p180
        %s284 = sand.u32 %s170, 1
        %s285 = scalar_lea.sflag [#allocation3], %s284
        %s286 = sand.u32 %s170, 1
        %s287 = smul.addr %s286, 8
        %s288 = scalar_lea.vmem [#allocation2], %s287
        %p289 = scmp.lt.s32.totalorder %s23, 1
        %s290 = scalar_select %p289, %s23, 1
        %p291 = scmp.lt.s32.totalorder %s24, 0
        %s292 = scalar_select %p291, %s24, 0
        %s293 = sadd.s32 %s292, %s290
        %s294 = smul.addr %s293, 8
        %s295 = scalar_lea.vmem %s0, %s294
        %p296 = scmp.lt.s32.totalorder %s23, 1
        %s297 = scalar_select %p296, %s23, 1
        %s298 = smul.addr %s297, 2
        %s299 = smul.addr %s298, 8
        %s300 = scalar_lea.vmem %s2, %s299
        %p301 = scmp.lt.s32.totalorder %s23, 1
        %s302 = scalar_select %p301, %s23, 1
        %s303 = smul.addr %s302, 2
        %s304 = smul.addr %s303, 8
        %s305 = scalar_lea.vmem %s3, %s304
        %p306 = scmp.lt.s32.totalorder %s23, 1
        %s307 = scalar_select %p306, %s23, 1
        %p308 = scmp.lt.s32.totalorder %s24, 0
        %s309 = scalar_select %p308, %s24, 0
        %s310 = sadd.s32 %s309, %s307
        %s311 = smul.addr %s310, 8
        %s312 = scalar_lea.vmem %s4, %s311
        %v313 = vld [vmem:[%s295] sm:$0xff]
        %v314 = vld [vmem:[%s1] sm:$0xff]
        %v315 = vld [vmem:[%s1 + $0x8] sm:$0xff]
        %v316 = vld [vmem:[%s300] sm:$0xff]
        %v317 = vld [vmem:[%s300 + $0x8] sm:$0x3]
        %v318 = vld [vmem:[%s305] sm:$0xff]
        %v319 = vld [vmem:[%s305 + $0x8] sm:$0x3]
        %vm320 = vcmask 130048
        %v322 = vsel %vm320, %v313, 0
        %324 = vmatprep.subr.mxu0 0.0
        %325 = vmatpush1.msra.mxu0 %v314
        %326 = vmatprep.subr.mxu0 0.0
        %327 = vmatpush1.msra.mxu0 %v315
        %328 = vmatprep.subr.mxu0 0.0
        %329 = vmatpush1.msra.mxu0 0.0
        %330 = vmatprep.subr.mxu0 0.0
        %331 = vmatpush1.msra.mxu0 0.0
        %332 = vmatprep.subr.mxu0 0.0
        %333 = vmatpush1.msra.mxu0 0.0
        %334 = vmatprep.subr.mxu0 0.0
        %335 = vmatpush1.msra.mxu0 0.0
        %336 = vmatprep.subr.mxu0 0.0
        %337 = vmatpush1.msra.mxu0 0.0
        %338 = vmatprep.subr.mxu0 0.0
        %339 = vmatpush1.msra.mxu0 0.0
        %340 = vmatprep.subr.mxu0 0.0
        %341 = vmatpush1.msra.mxu0 0.0
        %342 = vmatprep.subr.mxu0 0.0
        %343 = vmatpush1.msra.mxu0 0.0
        %344 = vmatprep.subr.mxu0 0.0
        %345 = vmatpush1.msra.mxu0 0.0
        %346 = vmatprep.subr.mxu0 0.0
        %347 = vmatpush1.msra.mxu0 0.0
        %348 = vmatprep.subr.mxu0 0.0
        %349 = vmatpush1.msra.mxu0 0.0
        %350 = vmatprep.subr.mxu0 0.0
        %351 = vmatpush1.msra.mxu0 0.0
        %352 = vmatprep.subr.mxu0 0.0
        %353 = vmatpush1.msra.mxu0 0.0
        %354 = vmatprep.subr.mxu0 0.0
        %355 = vmatpush1.msra.mxu0 0.0
        %356 = vmatprep.subr.mxu0 0.0
        %357 = vmatpush1.msra.mxu0 0.0
        %358 = vmatprep.subr.mxu0 0.0
        %359 = vmatpush1.msra.mxu0 0.0
        %360 = vmatprep.subr.mxu0 0.0
        %361 = vmatpush1.msra.mxu0 0.0
        %362 = vmatprep.subr.mxu0 0.0
        %363 = vmatpush1.msra.mxu0 0.0
        %364 = vmatprep.subr.mxu0 0.0
        %365 = vmatpush1.msra.mxu0 0.0
        %366 = vmatprep.subr.mxu0 0.0
        %367 = vmatpush1.msra.mxu0 0.0
        %368 = vmatprep.subr.mxu0 0.0
        %369 = vmatpush1.msra.mxu0 0.0
        %370 = vmatprep.subr.mxu0 0.0
        %371 = vmatpush1.msra.mxu0 0.0
        %372 = vmatprep.subr.mxu0 0.0
        %373 = vmatpush1.msra.mxu0 0.0
        %374 = vmatprep.subr.mxu0 0.0
        %375 = vmatpush1.msra.mxu0 0.0
        %376 = vmatprep.subr.mxu0 0.0
        %377 = vmatpush1.msra.mxu0 0.0
        %378 = vmatprep.subr.mxu0 0.0
        %379 = vmatpush1.msra.mxu0 0.0
        %380 = vmatprep.subr.mxu0 0.0
        %381 = vmatpush1.msra.mxu0 0.0
        %382 = vmatprep.subr.mxu0 0.0
        %383 = vmatpush1.msra.mxu0 0.0
        %384 = vmatprep.subr.mxu0 0.0
        %385 = vmatpush1.msra.mxu0 0.0
        %386 = vmatprep.subr.mxu0 0.0
        %387 = vmatpush1.msra.mxu0 0.0
        %388 = vmatprep.mubr.f32.mxu0 0.0
        %389 = vmatmul.mubr.f32.gmra.mrb[0].mxu0 %v322
        %v390 = vpop.f32.mrb[0].mxu0
        %v391 = vadd.f32 0.0, %v390
        %v392 = vpop.f32.mrb[0].mxu0
        %393 = vdwg.mxu0
        %vm394 = vcmask 261120
        %v396 = vsel %vm394, %v391, 0
        %v399 = vsel %vm394, %v316, 0
        %v402 = vsel %vm394, %v317, 0
        %404 = vmatprep.subr.mxu0 0.0
        %405 = vmatpush1.xpose.msra.mxu0 %v399
        %406 = vmatprep.subr.mxu0 0.0
        %407 = vmatpush1.xpose.msra.mxu0 %v402
        %408 = vmatprep.subr.mxu0 0.0
        %409 = vmatpush1.xpose.msra.mxu0 0.0
        %410 = vmatprep.subr.mxu0 0.0
        %411 = vmatpush1.xpose.msra.mxu0 0.0
        %412 = vmatprep.subr.mxu0 0.0
        %413 = vmatpush1.xpose.msra.mxu0 0.0
        %414 = vmatprep.subr.mxu0 0.0
        %415 = vmatpush1.xpose.msra.mxu0 0.0
        %416 = vmatprep.subr.mxu0 0.0
        %417 = vmatpush1.xpose.msra.mxu0 0.0
        %418 = vmatprep.subr.mxu0 0.0
        %419 = vmatpush1.xpose.msra.mxu0 0.0
        %420 = vmatprep.subr.mxu0 0.0
        %421 = vmatpush1.xpose.msra.mxu0 0.0
        %422 = vmatprep.subr.mxu0 0.0
        %423 = vmatpush1.xpose.msra.mxu0 0.0
        %424 = vmatprep.subr.mxu0 0.0
        %425 = vmatpush1.xpose.msra.mxu0 0.0
        %426 = vmatprep.subr.mxu0 0.0
        %427 = vmatpush1.xpose.msra.mxu0 0.0
        %428 = vmatprep.subr.mxu0 0.0
        %429 = vmatpush1.xpose.msra.mxu0 0.0
        %430 = vmatprep.subr.mxu0 0.0
        %431 = vmatpush1.xpose.msra.mxu0 0.0
        %432 = vmatprep.subr.mxu0 0.0
        %433 = vmatpush1.xpose.msra.mxu0 0.0
        %434 = vmatprep.subr.mxu0 0.0
        %435 = vmatpush1.xpose.msra.mxu0 0.0
        %436 = vmatprep.subr.mxu0 0.0
        %437 = vmatpush1.xpose.msra.mxu0 0.0
        %438 = vmatprep.subr.mxu0 0.0
        %439 = vmatpush1.xpose.msra.mxu0 0.0
        %440 = vmatprep.subr.mxu0 0.0
        %441 = vmatpush1.xpose.msra.mxu0 0.0
        %442 = vmatprep.subr.mxu0 0.0
        %443 = vmatpush1.xpose.msra.mxu0 0.0
        %444 = vmatprep.subr.mxu0 0.0
        %445 = vmatpush1.xpose.msra.mxu0 0.0
        %446 = vmatprep.subr.mxu0 0.0
        %447 = vmatpush1.xpose.msra.mxu0 0.0
        %448 = vmatprep.subr.mxu0 0.0
        %449 = vmatpush1.xpose.msra.mxu0 0.0
        %450 = vmatprep.subr.mxu0 0.0
        %451 = vmatpush1.xpose.msra.mxu0 0.0
        %452 = vmatprep.subr.mxu0 0.0
        %453 = vmatpush1.xpose.msra.mxu0 0.0
        %454 = vmatprep.subr.mxu0 0.0
        %455 = vmatpush1.xpose.msra.mxu0 0.0
        %456 = vmatprep.subr.mxu0 0.0
        %457 = vmatpush1.xpose.msra.mxu0 0.0
        %458 = vmatprep.subr.mxu0 0.0
        %459 = vmatpush1.xpose.msra.mxu0 0.0
        %460 = vmatprep.subr.mxu0 0.0
        %461 = vmatpush1.xpose.msra.mxu0 0.0
        %462 = vmatprep.subr.mxu0 0.0
        %463 = vmatpush1.xpose.msra.mxu0 0.0
        %464 = vmatprep.subr.mxu0 0.0
        %465 = vmatpush1.xpose.msra.mxu0 0.0
        %466 = vmatprep.subr.mxu0 0.0
        %467 = vmatpush1.xpose.msra.mxu0 0.0
        %468 = vmatprep.mubr.f32.mxu0 0.0
        %469 = vmatmul.mubr.f32.gmra.mrb[0].mxu0 %v396
        %v470 = vpop.f32.mrb[0].mxu0
        %v471 = vadd.f32 0.0, %v470
        %v472 = vpop.f32.mrb[0].mxu0
        %473 = vdwg.mxu0
        %v474 = vmul.f32 %v471, 0.17677669
        %v475 = vlaneseq
        %v476 = vand.u32 %v475, 127
        %v477 = vld [vmem:[%s312] sm:$0xff]
        %478 = vset.pattern.permute.xlu0 0
        %479 = vperm.xlu0 %478, %v477
        %v480 = vpop.permute.xlu0 %479
        %vm481 = vcmp.lt.s32.totalorder %v476, %v480
        %v482 = vsel %vm481, %v474, -1000000.0
        %vm483 = vcmask 80896
        %v484 = vsel %vm483, %v482, -inf
        %485 = vmax.xlane.f32.xlu0 %v484
        %v486 = vpop.xlane.xlu0 %485
        %v487 = vsub.f32 %v482, %v486
        %v488 = vmul.f32 %v487, 1.442695
        %v489 = vpow.pop %v488
        %v490 = vsel %vm483, %v489, 0.0
        %491 = vadd.xlane.f32.xlu0 %v490
        %v492 = vpop.xlane.xlu0 %491
        %v493 = vrcp.pop %v492
        %v494 = vmul.f32 %v489, %v493
        %v496 = vsel %vm483, %v494, 0
        %vm498 = vcmask 1041408
        %v500 = vsel %vm498, %v319, 0
        %502 = vmatprep.subr.mxu0 0.0
        %503 = vmatpush1.msra.mxu0 %v318
        %504 = vmatprep.subr.mxu0 0.0
        %505 = vmatpush1.msra.mxu0 %v500
        %506 = vmatprep.subr.mxu0 0.0
        %507 = vmatpush1.msra.mxu0 0.0
        %508 = vmatprep.subr.mxu0 0.0
        %509 = vmatpush1.msra.mxu0 0.0
        %510 = vmatprep.subr.mxu0 0.0
        %511 = vmatpush1.msra.mxu0 0.0
        %512 = vmatprep.subr.mxu0 0.0
        %513 = vmatpush1.msra.mxu0 0.0
        %514 = vmatprep.subr.mxu0 0.0
        %515 = vmatpush1.msra.mxu0 0.0
        %516 = vmatprep.subr.mxu0 0.0
        %517 = vmatpush1.msra.mxu0 0.0
        %518 = vmatprep.subr.mxu0 0.0
        %519 = vmatpush1.msra.mxu0 0.0
        %520 = vmatprep.subr.mxu0 0.0
        %521 = vmatpush1.msra.mxu0 0.0
        %522 = vmatprep.subr.mxu0 0.0
        %523 = vmatpush1.msra.mxu0 0.0
        %524 = vmatprep.subr.mxu0 0.0
        %525 = vmatpush1.msra.mxu0 0.0
        %526 = vmatprep.subr.mxu0 0.0
        %527 = vmatpush1.msra.mxu0 0.0
        %528 = vmatprep.subr.mxu0 0.0
        %529 = vmatpush1.msra.mxu0 0.0
        %530 = vmatprep.subr.mxu0 0.0
        %531 = vmatpush1.msra.mxu0 0.0
        %532 = vmatprep.subr.mxu0 0.0
        %533 = vmatpush1.msra.mxu0 0.0
        %534 = vmatprep.subr.mxu0 0.0
        %535 = vmatpush1.msra.mxu0 0.0
        %536 = vmatprep.subr.mxu0 0.0
        %537 = vmatpush1.msra.mxu0 0.0
        %538 = vmatprep.subr.mxu0 0.0
        %539 = vmatpush1.msra.mxu0 0.0
        %540 = vmatprep.subr.mxu0 0.0
        %541 = vmatpush1.msra.mxu0 0.0
        %542 = vmatprep.subr.mxu0 0.0
        %543 = vmatpush1.msra.mxu0 0.0
        %544 = vmatprep.subr.mxu0 0.0
        %545 = vmatpush1.msra.mxu0 0.0
        %546 = vmatprep.subr.mxu0 0.0
        %547 = vmatpush1.msra.mxu0 0.0
        %548 = vmatprep.subr.mxu0 0.0
        %549 = vmatpush1.msra.mxu0 0.0
        %550 = vmatprep.subr.mxu0 0.0
        %551 = vmatpush1.msra.mxu0 0.0
        %552 = vmatprep.subr.mxu0 0.0
        %553 = vmatpush1.msra.mxu0 0.0
        %554 = vmatprep.subr.mxu0 0.0
        %555 = vmatpush1.msra.mxu0 0.0
        %556 = vmatprep.subr.mxu0 0.0
        %557 = vmatpush1.msra.mxu0 0.0
        %558 = vmatprep.subr.mxu0 0.0
        %559 = vmatpush1.msra.mxu0 0.0
        %560 = vmatprep.subr.mxu0 0.0
        %561 = vmatpush1.msra.mxu0 0.0
        %562 = vmatprep.subr.mxu0 0.0
        %563 = vmatpush1.msra.mxu0 0.0
        %564 = vmatprep.subr.mxu0 0.0
        %565 = vmatpush1.msra.mxu0 0.0
        %566 = vmatprep.mubr.f32.mxu0 0.0
        %567 = vmatmul.mubr.f32.gmra.mrb[0].mxu0 %v496
        %v568 = vpop.f32.mrb[0].mxu0
        %v569 = vadd.f32 0.0, %v568
        %v570 = vpop.f32.mrb[0].mxu0
        %571 = vdwg.mxu0
        %572 = vst [vmem:[%s288] sm:$0xff] %v569
        %s573 = sand.u32 %s170, 1
        %s574 = scalar_lea.sflag [#allocation3], %s573
        %s575 = sand.u32 %s170, 1
        %s576 = smul.addr %s575, 8
        %s577 = scalar_lea.vmem [#allocation2], %s576
        // Predicated region
        $region41: #{tpu_custom_call.1} parent=39 // pred_check
          %p578 = pneg %p180
        $region42: #{tpu_custom_call.1} parent=39 // pred_check_branch
          %580 = sbr.rel (%p578) target = $region44
        $region43: #{tpu_custom_call.1} parent=39 // pred_region
          %s582 = ssub.s32 128, 128
          %583 = vsyncadd %s574, %s582
          %s584 = sadd.s32 %s24, %s23
          %s585 = smul.addr %s584, 128
          %s586 = scalar_lea.hbm %s5, %s585
          %s588 = sshll.u32 %s577, 4
          %s589 = int_to_ptr.vmem [resolvable:$true] %s588
          %591 = dma.vmem_to_hbm [thread:$0]  %s589, 128, %s586, %s574
        $region44: #{tpu_custom_call.1} parent=39 // pred_fallthru
          _
      $region40: #{tpu_custom_call.1} parent=5 // pred_fallthru
        _
      %p592 = scmp.le.s32.totalorder 2, %s14
      // Predicated region
      $region45: #{tpu_custom_call.1} parent=5 // pred_check
        %p593 = pneg %p592
      $region46: #{tpu_custom_call.1} parent=5 // pred_check_branch
        %595 = sbr.rel (%p593) target = $region48
      $region47: #{tpu_custom_call.1} parent=5 // pred_region
        %s596 = ssub.s32 %s14, 2
        // Predicated region
        $region49: #{tpu_custom_call.1} parent=47 // pred_check
          %p597 = pneg %p186
        $region50: #{tpu_custom_call.1} parent=47 // pred_check_branch
          %599 = sbr.rel (%p597) target = $region52
        $region51: #{tpu_custom_call.1} parent=47 // pred_region
          %s600 = sand.u32 %s171, 1
          %s601 = scalar_lea.sflag [#allocation3], %s600
          %s602 = sand.u32 %s171, 1
          %s603 = smul.addr %s602, 8
          %s604 = scalar_lea.vmem [#allocation2], %s603
          %605 = dma.done %s601, 128
        $region52: #{tpu_custom_call.1} parent=47 // pred_fallthru
          _
      $region48: #{tpu_custom_call.1} parent=5 // pred_fallthru
        _
    $region6: #{tpu_custom_call.1} parent=1 // loop_footer
      %s18 = sadd.s32 1, %s14
    $region7: #{tpu_custom_call.1} parent=1 // loop_footer_branch
      %13 = sbr.rel target = $region3
    $region8: #{tpu_custom_call.1} parent=1 // loop_exit
      _
    %606 = vsyncpa [#allocation3], 1
    %s607 = scalar_lea.sflag [#allocation3], 1
    %608 = vsyncpa %s607, 1

</llo_original>
